<compile_context>
chip_gen: v7x
topology: tpu7x:2x2x1
jax: 0.10.0
libtpu: 0.0.40
codegen_flags: <defaults>
</compile_context>

<pallas_src>
import jax
import jax.numpy as jnp
from jax.experimental import pallas as pl
from jax.experimental.pallas import tpu as pltpu

# Rough per-row VMEM footprint (bytes): obs + out double-buffered tiles plus
# h / logits / e temps, every array lane-padded to 128 f32 lanes (512 B/row).
_BYTES_PER_ROW_VMEM = 7 * 512
_VMEM_TILE_BUDGET = 40 << 20   # keep the per-step footprint under ~40 MiB
_VMEM_LIMIT_BYTES = 48 << 20   # scoped limit: > all defaults, < v7x 64 MiB phys


def mappo_actor_kernel(obs_ref, w1_ref, b1_ref, w2_ref, b2_ref, out_ref):
    # Hidden layer: (TB, obs_dim) @ (obs_dim, 64) + (1, 64) -> ReLU.
    h = jnp.dot(obs_ref[...], w1_ref[...],
                preferred_element_type=jnp.float32) + b1_ref[...]
    h = jnp.maximum(h, 0.0)
    # Output layer: (TB, 64) @ (64, act_dim) + (1, act_dim).
    logits = jnp.dot(h, w2_ref[...],
                     preferred_element_type=jnp.float32) + b2_ref[...]
    # Numerically-stable, EXACT softmax over the last axis (rows sum to 1 to
    # f32 precision, matching torch.nn.Softmax).
    m = jnp.max(logits, axis=-1, keepdims=True)
    e = jnp.exp(logits - m)
    probs = e / jnp.sum(e, axis=-1, keepdims=True)
    out_ref[...] = probs.astype(out_ref.dtype)


def mappo_actor_forward(obs, w1, b1, w2, b2, *, tile_b=8192):
    B, obs_dim = obs.shape
    hidden = w1.shape[1]
    act_dim = w2.shape[1]

    # --- batch tiling -----------------------------------------------------
    # Big tiles amortize the ~0.35us per-grid-step pipeline overhead (the
    # kernel is HBM/overhead-bound, not MXU-bound), subject to the VMEM
    # budget above (lane-padded obs/h/logits/e/out temps + double buffering).
    tile_b = int(min(int(tile_b), _VMEM_TILE_BUDGET // _BYTES_PER_ROW_VMEM))
    tile_b = max(8, (tile_b // 8) * 8)             # sublane-multiple

    B_pad8 = int(8 * pl.cdiv(B, 8))                # 8-aligned batch
    tile_b = min(tile_b, B_pad8)                   # never exceed the batch

    # Prefer >= 2 grid steps when the batch allows it so the "parallel" batch
    # axis can actually shard across v7x's two TensorCores (no-op on v5e/v6e).
    if B_pad8 >= 16 and int(pl.cdiv(B_pad8, tile_b)) < 2:
        tile_b = int(8 * pl.cdiv(pl.cdiv(B_pad8, 2), 8))

    num_tiles = int(pl.cdiv(B_pad8, tile_b))
    B_pad = num_tiles * tile_b
    if B_pad != B:
        # Zero-pad; padded rows produce bias-only softmax, computed harmlessly
        # and sliced off below (no in-kernel reductions over the batch axis).
        obs = jnp.pad(obs, ((0, B_pad - B), (0, 0)))

    out = pl.pallas_call(
        mappo_actor_kernel,
        out_shape=jax.ShapeDtypeStruct((B_pad, act_dim), jnp.float32),
        grid_spec=pl.GridSpec(
            grid=(num_tiles,),
            in_specs=[
                pl.BlockSpec((tile_b, obs_dim), lambda i: (i, 0)),   # obs tile
                pl.BlockSpec((obs_dim, hidden), lambda i: (0, 0)),   # W1 (resident)
                pl.BlockSpec((1, hidden), lambda i: (0, 0)),         # b1
                pl.BlockSpec((hidden, act_dim), lambda i: (0, 0)),   # W2 (resident)
                pl.BlockSpec((1, act_dim), lambda i: (0, 0)),        # b2
            ],
            out_specs=pl.BlockSpec((tile_b, act_dim), lambda i: (i, 0)),
        ),
        compiler_params=pltpu.CompilerParams(
            # Batch axis is embarrassingly parallel -> sharded across the two
            # TensorCores on v7x; no-op on v5e/v6e.
            dimension_semantics=("parallel",),
            # Raise the scoped VMEM limit so large tiles fit on v5e (16 MiB
            # default) and v6e/v7x (32 MiB default) without spilling, while
            # staying under v7x's 64 MiB physical per-TC VMEM.
            vmem_limit_bytes=_VMEM_LIMIT_BYTES,
        ),
    )(obs, w1, b1, w2, b2)

    if B_pad != B:
        out = out[:B]
    return out


def init_params(key, obs_dim, act_dim, hidden=64):
    """Deterministic init mimicking nn.Linear defaults (uniform +/- 1/sqrt(fan_in))."""
    k1, k2, k3, k4 = jax.random.split(key, 4)
    lim1 = 1.0 / jnp.sqrt(obs_dim)
    lim2 = 1.0 / jnp.sqrt(hidden)
    # Stored as (in_features, out_features), i.e. transpose of torch's weight.
    w1 = jax.random.uniform(k1, (obs_dim, hidden), jnp.float32, -lim1, lim1)
    b1 = jax.random.uniform(k2, (1, hidden), jnp.float32, -lim1, lim1)
    w2 = jax.random.uniform(k3, (hidden, act_dim), jnp.float32, -lim2, lim2)
    b2 = jax.random.uniform(k4, (1, act_dim), jnp.float32, -lim2, lim2)
    return w1, b1, w2, b2


def reference_forward(obs, w1, b1, w2, b2):
    h = jnp.maximum(obs @ w1 + b1, 0.0)
    logits = h @ w2 + b2
    return jax.nn.softmax(logits, axis=-1)


if __name__ == "__main__":
    # Small, module-consistent shapes; B=10 exercises the pad path and the
    # >=2-grid-step (megacore) path (B_pad8=16 -> two 8-row tiles).
    B, OBS_DIM, ACT_DIM = 10, 32, 8

    key = jax.random.PRNGKey(0)
    k_obs, k_params = jax.random.split(key)
    obs = jax.random.normal(k_obs, (B, OBS_DIM), jnp.float32)
    w1, b1, w2, b2 = init_params(k_params, OBS_DIM, ACT_DIM)

    out = mappo_actor_forward(obs, w1, b1, w2, b2)
    out = jax.block_until_ready(out)

    ref = reference_forward(obs, w1, b1, w2, b2)
    assert out.shape == (B, ACT_DIM)
    assert jnp.allclose(out, ref, atol=1e-5, rtol=1e-5)
    assert jnp.allclose(jnp.sum(out, axis=-1), jnp.ones((B,)), atol=1e-5)

    print("KERNEL_OK")
</pallas_src>

<mosaic_0001>
module attributes {stable_mosaic.version = 11 : i64} {
  func.func @mappo_actor_kernel(%arg0: i32, %arg1: memref<8x32xf32, #tpu.memory_space<vmem>>, %arg2: memref<32x64xf32, #tpu.memory_space<vmem>>, %arg3: memref<1x64xf32, #tpu.memory_space<vmem>>, %arg4: memref<64x8xf32, #tpu.memory_space<vmem>>, %arg5: memref<1x8xf32, #tpu.memory_space<vmem>>, %arg6: memref<8x8xf32, #tpu.memory_space<vmem>>) attributes {dimension_semantics = [#tpu.dimension_semantics<parallel>], iteration_bounds = array<i64: 2>, scalar_prefetch = 0 : i64, scratch_operands = 0 : i64, tpu.core_type = #tpu.core_type<tc>, window_params = [{transform_indices = @transform_0, window_bounds = array<i64: 8, 32>}, {pipeline_mode = #tpu.pipeline_mode<synchronous>, transform_indices = @transform_1, window_bounds = array<i64: 32, 64>}, {pipeline_mode = #tpu.pipeline_mode<synchronous>, transform_indices = @transform_2, window_bounds = array<i64: 1, 64>}, {pipeline_mode = #tpu.pipeline_mode<synchronous>, transform_indices = @transform_3, window_bounds = array<i64: 64, 8>}, {pipeline_mode = #tpu.pipeline_mode<synchronous>, transform_indices = @transform_4, window_bounds = array<i64: 1, 8>}, {transform_indices = @transform_5, window_bounds = array<i64: 8, 8>}]} {
    %c0 = arith.constant 0 : index
    %c0_0 = arith.constant 0 : index
    %0 = vector.load %arg1[%c0, %c0_0] : memref<8x32xf32, #tpu.memory_space<vmem>>, vector<8x32xf32>
    %c0_1 = arith.constant 0 : index
    %c0_2 = arith.constant 0 : index
    %1 = vector.load %arg2[%c0_1, %c0_2] : memref<32x64xf32, #tpu.memory_space<vmem>>, vector<32x64xf32>
    %cst = arith.constant dense<0.000000e+00> : vector<8x64xf32>
    %2 = tpu.matmul %0, %1, %cst {dimension_numbers = #tpu.dot_dimension_numbers<[1], [0], [0], [1], [0, 0, 1, 1], [], []>} : vector<8x32xf32>, vector<32x64xf32>, vector<8x64xf32> -> vector<8x64xf32>
    %c0_3 = arith.constant 0 : index
    %c0_4 = arith.constant 0 : index
    %3 = vector.load %arg3[%c0_3, %c0_4] : memref<1x64xf32, #tpu.memory_space<vmem>>, vector<1x64xf32>
    %4 = vector.broadcast %3 : vector<1x64xf32> to vector<8x64xf32>
    %5 = arith.addf %2, %4 : vector<8x64xf32>
    %cst_5 = arith.constant 0.000000e+00 : f32
    %6 = vector.broadcast %cst_5 : f32 to vector<8x64xf32>
    %7 = arith.maximumf %5, %6 : vector<8x64xf32>
    %c0_6 = arith.constant 0 : index
    %c0_7 = arith.constant 0 : index
    %8 = vector.load %arg4[%c0_6, %c0_7] : memref<64x8xf32, #tpu.memory_space<vmem>>, vector<64x8xf32>
    %cst_8 = arith.constant dense<0.000000e+00> : vector<8x8xf32>
    %9 = tpu.matmul %7, %8, %cst_8 {dimension_numbers = #tpu.dot_dimension_numbers<[1], [0], [0], [1], [0, 0, 1, 1], [], []>} : vector<8x64xf32>, vector<64x8xf32>, vector<8x8xf32> -> vector<8x8xf32>
    %c0_9 = arith.constant 0 : index
    %c0_10 = arith.constant 0 : index
    %10 = vector.load %arg5[%c0_9, %c0_10] : memref<1x8xf32, #tpu.memory_space<vmem>>, vector<1x8xf32>
    %11 = vector.broadcast %10 : vector<1x8xf32> to vector<8x8xf32>
    %12 = arith.addf %9, %11 : vector<8x8xf32>
    %cst_11 = arith.constant dense<0xFF800000> : vector<8xf32>
    %13 = vector.multi_reduction <maximumf>, %12, %cst_11 [1] : vector<8x8xf32> to vector<8xf32>
    %14 = vector.shape_cast %13 : vector<8xf32> to vector<8x1xf32>
    %15 = vector.broadcast %14 : vector<8x1xf32> to vector<8x8xf32>
    %16 = arith.subf %12, %15 : vector<8x8xf32>
    %17 = math.exp %16 : vector<8x8xf32>
    %cst_12 = arith.constant dense<0.000000e+00> : vector<8xf32>
    %18 = vector.multi_reduction <add>, %17, %cst_12 [1] : vector<8x8xf32> to vector<8xf32>
    %19 = vector.shape_cast %18 : vector<8xf32> to vector<8x1xf32>
    %20 = vector.broadcast %19 : vector<8x1xf32> to vector<8x8xf32>
    %21 = arith.divf %17, %20 : vector<8x8xf32>
    %c0_13 = arith.constant 0 : index
    %c0_14 = arith.constant 0 : index
    %22 = vector.load %arg6[%c0_13, %c0_14] : memref<8x8xf32, #tpu.memory_space<vmem>>, vector<8x8xf32>
    tpu.vector_store %arg6[%c0_13, %c0_14], %21 {strides = array<i32>} : memref<8x8xf32, #tpu.memory_space<vmem>>, vector<8x8xf32>,
    return
  }
  func.func @transform_0(%arg0: i32) -> (i32, i32) {
    %c0_i32 = arith.constant 0 : i32
    %c0_i32_0 = arith.constant 0 : i32
    return %arg0, %c0_i32 : i32, i32
  }
  func.func @transform_1(%arg0: i32) -> (i32, i32) {
    %c0_i32 = arith.constant 0 : i32
    %c0_i32_0 = arith.constant 0 : i32
    %c0_i32_1 = arith.constant 0 : i32
    return %c0_i32, %c0_i32_0 : i32, i32
  }
  func.func @transform_2(%arg0: i32) -> (i32, i32) {
    %c0_i32 = arith.constant 0 : i32
    %c0_i32_0 = arith.constant 0 : i32
    %c0_i32_1 = arith.constant 0 : i32
    return %c0_i32, %c0_i32_0 : i32, i32
  }
  func.func @transform_3(%arg0: i32) -> (i32, i32) {
    %c0_i32 = arith.constant 0 : i32
    %c0_i32_0 = arith.constant 0 : i32
    %c0_i32_1 = arith.constant 0 : i32
    return %c0_i32, %c0_i32_0 : i32, i32
  }
  func.func @transform_4(%arg0: i32) -> (i32, i32) {
    %c0_i32 = arith.constant 0 : i32
    %c0_i32_0 = arith.constant 0 : i32
    %c0_i32_1 = arith.constant 0 : i32
    return %c0_i32, %c0_i32_0 : i32, i32
  }
  func.func @transform_5(%arg0: i32) -> (i32, i32) {
    %c0_i32 = arith.constant 0 : i32
    %c0_i32_0 = arith.constant 0 : i32
    return %arg0, %c0_i32 : i32, i32
  }
}

</mosaic_0001>

<llo_original>
// kernel: tpu_custom_call.1
$region0: #{tpu_custom_call.1}
  #allocation0 [shape = 'u32[]', space=smem, size = 0x4, offset = 0x4, fixed_abs, tag = 'smem constant byte address 0x4 - core index']
  #allocation1 [shape = 'u32[144,128]{1,0:T(1,128)}', space=vmem, size = 0x12000, scoped, tag = 'internal scratch']
  %s0 = inlined_call_operand.vmem [shape: f32[16,32], index: 0, kind: input, shape index: {}]
  %s1 = inlined_call_operand.vmem [shape: f32[32,64], index: 1, kind: input, shape index: {}]
  %s2 = inlined_call_operand.vmem [shape: f32[1,64], index: 2, kind: input, shape index: {}]
  %s3 = inlined_call_operand.vmem [shape: f32[64,8], index: 3, kind: input, shape index: {}]
  %s4 = inlined_call_operand.vmem [shape: f32[1,8], index: 4, kind: input, shape index: {}]
  %s5 = inlined_call_operand.vmem [shape: f32[16,8], index: 5, kind: output, shape index: {}]
  %s6 = sld [smem:[#allocation0]]
  $region53: #{tpu_custom_call.1} parent=0
    _
  %s8 = ssub.s32 1, %s6
  %s9 = scalar_select 0, %s8, %s6
  loop: start=0, step=1, limit=4
  $region2: #{tpu_custom_call.1} parent=0 // loop_pre_header
    _
  $region3: #{tpu_custom_call.1} parent=0 // loop_header
    %s11 = sphi 0, %s15
    %p12 = scmp.ge.s32.totalorder %s11, 4
    %s21 = sphi 0, %s23
    %s24 = sphi 0, %s21
    %s25 = sphi 0, %s24
    %s41 = sphi 0, %s25
    %s45 = sphi 0, %s45
    %s47 = sphi 0, %s45
    %s48 = sphi 0, %s47
    %s62 = sphi 0, %s48
    %s66 = sphi 0, %s66
    %s68 = sphi 0, %s66
    %s69 = sphi 0, %s68
    %s83 = sphi 0, %s69
    %s87 = sphi 0, %s87
    %s89 = sphi 0, %s87
    %s90 = sphi 0, %s89
    %s104 = sphi 0, %s90
    %s108 = sphi 0, %s108
    %s110 = sphi 0, %s108
    %s111 = sphi 0, %s110
    %s125 = sphi 0, %s111
    %s131 = sphi 0, %s133
    %s134 = sphi 0, %s131
    %s135 = sphi 0, %s134
    %s151 = sphi 0, %s135
  $region4: #{tpu_custom_call.1} parent=0 // loop_header_branch
    %14 = sbr.rel (%p12) target = $region8
  $region5: #{tpu_custom_call.1} parent=0 // loop_body
    %s16 = ssub.s32 %s11, 1
    %s17 = ssub.s32 %s11, 2
    %s18 = sadd.s32 %s11, 1
    %s19 = ssub.s32 %s11, %s18
    %p20 = scmp.eq.s32.totalorder %s19, 0
    %s22 = sadd.s32 %s21, 1
    %s23 = scalar_select %p20, %s21, %s22
    %p26 = pneg %p20
    %p27 = scmp.eq.s32.totalorder %s11, 1
    %p28 = por %p26, %p27
    %p29 = scmp.ne.s32.totalorder %s21, %s24
    %p30 = scmp.eq.s32.totalorder %s11, 0
    %p31 = por %p29, %p30
    %p32 = scmp.ne.s32.totalorder %s21, %s24
    %p33 = scmp.eq.s32.totalorder %s16, 1
    %p34 = por %p32, %p33
    %p35 = scmp.ne.s32.totalorder %s24, %s25
    %p36 = scmp.eq.s32.totalorder %s16, 0
    %p37 = por %p35, %p36
    %p38 = scmp.ne.s32.totalorder %s24, %s25
    %p39 = scmp.eq.s32.totalorder %s17, 1
    %p40 = por %p38, %p39
    %p42 = scmp.ne.s32.totalorder %s25, %s41
    %p43 = scmp.eq.s32.totalorder %s17, 0
    %p44 = por %p42, %p43
    %s46 = sadd.s32 %s45, 1
    %p49 = scmp.eq.s32.totalorder %s11, 1
    %p50 = scmp.ne.s32.totalorder %s45, %s47
    %p51 = scmp.eq.s32.totalorder %s11, 0
    %p52 = por %p50, %p51
    %p53 = scmp.ne.s32.totalorder %s45, %s47
    %p54 = scmp.eq.s32.totalorder %s16, 1
    %p55 = por %p53, %p54
    %p56 = scmp.ne.s32.totalorder %s47, %s48
    %p57 = scmp.eq.s32.totalorder %s16, 0
    %p58 = por %p56, %p57
    %p59 = scmp.ne.s32.totalorder %s47, %s48
    %p60 = scmp.eq.s32.totalorder %s17, 1
    %p61 = por %p59, %p60
    %p63 = scmp.ne.s32.totalorder %s48, %s62
    %p64 = scmp.eq.s32.totalorder %s17, 0
    %p65 = por %p63, %p64
    %s67 = sadd.s32 %s66, 1
    %p70 = scmp.eq.s32.totalorder %s11, 1
    %p71 = scmp.ne.s32.totalorder %s66, %s68
    %p72 = scmp.eq.s32.totalorder %s11, 0
    %p73 = por %p71, %p72
    %p74 = scmp.ne.s32.totalorder %s66, %s68
    %p75 = scmp.eq.s32.totalorder %s16, 1
    %p76 = por %p74, %p75
    %p77 = scmp.ne.s32.totalorder %s68, %s69
    %p78 = scmp.eq.s32.totalorder %s16, 0
    %p79 = por %p77, %p78
    %p80 = scmp.ne.s32.totalorder %s68, %s69
    %p81 = scmp.eq.s32.totalorder %s17, 1
    %p82 = por %p80, %p81
    %p84 = scmp.ne.s32.totalorder %s69, %s83
    %p85 = scmp.eq.s32.totalorder %s17, 0
    %p86 = por %p84, %p85
    %s88 = sadd.s32 %s87, 1
    %p91 = scmp.eq.s32.totalorder %s11, 1
    %p92 = scmp.ne.s32.totalorder %s87, %s89
    %p93 = scmp.eq.s32.totalorder %s11, 0
    %p94 = por %p92, %p93
    %p95 = scmp.ne.s32.totalorder %s87, %s89
    %p96 = scmp.eq.s32.totalorder %s16, 1
    %p97 = por %p95, %p96
    %p98 = scmp.ne.s32.totalorder %s89, %s90
    %p99 = scmp.eq.s32.totalorder %s16, 0
    %p100 = por %p98, %p99
    %p101 = scmp.ne.s32.totalorder %s89, %s90
    %p102 = scmp.eq.s32.totalorder %s17, 1
    %p103 = por %p101, %p102
    %p105 = scmp.ne.s32.totalorder %s90, %s104
    %p106 = scmp.eq.s32.totalorder %s17, 0
    %p107 = por %p105, %p106
    %s109 = sadd.s32 %s108, 1
    %p112 = scmp.eq.s32.totalorder %s11, 1
    %p113 = scmp.ne.s32.totalorder %s108, %s110
    %p114 = scmp.eq.s32.totalorder %s11, 0
    %p115 = por %p113, %p114
    %p116 = scmp.ne.s32.totalorder %s108, %s110
    %p117 = scmp.eq.s32.totalorder %s16, 1
    %p118 = por %p116, %p117
    %p119 = scmp.ne.s32.totalorder %s110, %s111
    %p120 = scmp.eq.s32.totalorder %s16, 0
    %p121 = por %p119, %p120
    %p122 = scmp.ne.s32.totalorder %s110, %s111
    %p123 = scmp.eq.s32.totalorder %s17, 1
    %p124 = por %p122, %p123
    %p126 = scmp.ne.s32.totalorder %s111, %s125
    %p127 = scmp.eq.s32.totalorder %s17, 0
    %p128 = por %p126, %p127
    %s129 = ssub.s32 %s11, %s18
    %p130 = scmp.eq.s32.totalorder %s129, 0
    %s132 = sadd.s32 %s131, 1
    %s133 = scalar_select %p130, %s131, %s132
    %p136 = pneg %p130
    %p137 = scmp.eq.s32.totalorder %s11, 1
    %p138 = por %p136, %p137
    %p139 = scmp.ne.s32.totalorder %s131, %s134
    %p140 = scmp.eq.s32.totalorder %s11, 0
    %p141 = por %p139, %p140
    %p142 = scmp.ne.s32.totalorder %s131, %s134
    %p143 = scmp.eq.s32.totalorder %s16, 1
    %p144 = por %p142, %p143
    %p145 = scmp.ne.s32.totalorder %s134, %s135
    %p146 = scmp.eq.s32.totalorder %s16, 0
    %p147 = por %p145, %p146
    %p148 = scmp.ne.s32.totalorder %s134, %s135
    %p149 = scmp.eq.s32.totalorder %s17, 1
    %p150 = por %p148, %p149
    %p152 = scmp.ne.s32.totalorder %s135, %s151
    %p153 = scmp.eq.s32.totalorder %s17, 0
    %p154 = por %p152, %p153
    %p155 = scmp.le.s32.totalorder 1, %s11
    %p156 = scmp.lt.s32.totalorder %s11, 3
    %p157 = pnand %p155, %p156
    %p158 = pneg %p157
    // Predicated region
    $region9: #{tpu_custom_call.1} parent=5 // pred_check
      _
    $region10: #{tpu_custom_call.1} parent=5 // pred_check_branch
      %160 = sbr.rel (%p157) target = $region12
    $region11: #{tpu_custom_call.1} parent=5 // pred_region
      %s161 = ssub.s32 %s11, 1
      // Predicated region
      $region13: #{tpu_custom_call.1} parent=11 // pred_check
        %p162 = pneg %p58
      $region14: #{tpu_custom_call.1} parent=11 // pred_check_branch
        %164 = sbr.rel (%p162) target = $region16
      $region15: #{tpu_custom_call.1} parent=11 // pred_region
        _
      $region16: #{tpu_custom_call.1} parent=11 // pred_fallthru
        _
      // Predicated region
      $region17: #{tpu_custom_call.1} parent=11 // pred_check
        %p165 = pneg %p79
      $region18: #{tpu_custom_call.1} parent=11 // pred_check_branch
        %167 = sbr.rel (%p165) target = $region20
      $region19: #{tpu_custom_call.1} parent=11 // pred_region
        _
      $region20: #{tpu_custom_call.1} parent=11 // pred_fallthru
        _
      // Predicated region
      $region21: #{tpu_custom_call.1} parent=11 // pred_check
        %p168 = pneg %p100
      $region22: #{tpu_custom_call.1} parent=11 // pred_check_branch
        %170 = sbr.rel (%p168) target = $region24
      $region23: #{tpu_custom_call.1} parent=11 // pred_region
        _
      $region24: #{tpu_custom_call.1} parent=11 // pred_fallthru
        _
      // Predicated region
      $region25: #{tpu_custom_call.1} parent=11 // pred_check
        %p171 = pneg %p121
      $region26: #{tpu_custom_call.1} parent=11 // pred_check_branch
        %173 = sbr.rel (%p171) target = $region28
      $region27: #{tpu_custom_call.1} parent=11 // pred_region
        _
      $region28: #{tpu_custom_call.1} parent=11 // pred_fallthru
        _
    $region12: #{tpu_custom_call.1} parent=5 // pred_fallthru
      _
    %p174 = scmp.lt.s32.totalorder %s11, 2
    // Predicated region
    $region29: #{tpu_custom_call.1} parent=5 // pred_check
      %p175 = pneg %p174
    $region30: #{tpu_custom_call.1} parent=5 // pred_check_branch
      %177 = sbr.rel (%p175) target = $region32
    $region31: #{tpu_custom_call.1} parent=5 // pred_region
      // Predicated region
      $region33: #{tpu_custom_call.1} parent=31 // pred_check
        %p178 = pneg %p31
      $region34: #{tpu_custom_call.1} parent=31 // pred_check_branch
        %180 = sbr.rel (%p178) target = $region36
      $region35: #{tpu_custom_call.1} parent=31 // pred_region
        %p181 = scmp.lt.s32.totalorder %s11, 1
        %s182 = scalar_select %p181, %s11, 1
        %s183 = smul.addr %s182, 8
        %s184 = scalar_lea.vmem %s0, %s183
      $region36: #{tpu_custom_call.1} parent=31 // pred_fallthru
        _
    $region32: #{tpu_custom_call.1} parent=5 // pred_fallthru
      _
    %p185 = scmp.le.s32.totalorder 1, %s11
    %p186 = scmp.lt.s32.totalorder %s11, 3
    %p187 = pnand %p185, %p186
    %p188 = pneg %p187
    // Predicated region
    $region37: #{tpu_custom_call.1} parent=5 // pred_check
      _
    $region38: #{tpu_custom_call.1} parent=5 // pred_check_branch
      %190 = sbr.rel (%p187) target = $region40
    $region39: #{tpu_custom_call.1} parent=5 // pred_region
      %s191 = ssub.s32 %s11, 1
      %p192 = scmp.lt.s32.totalorder %s16, 1
      %s193 = scalar_select %p192, %s16, 1
      %s194 = smul.addr %s193, 8
      %s195 = scalar_lea.vmem %s0, %s194
      %p196 = pneg %p37
      %p197 = pneg %p34
      %p198 = pneg %p58
      %p199 = pneg %p55
      %p200 = pneg %p79
      %p201 = pneg %p76
      %p202 = pneg %p100
      %p203 = pneg %p97
      %p204 = pneg %p121
      %p205 = pneg %p118
      %p206 = pneg %p147
      %p207 = pneg %p144
      %p208 = scmp.lt.s32.totalorder %s16, 1
      %s209 = scalar_select %p208, %s16, 1
      %s210 = smul.addr %s209, 8
      %s211 = scalar_lea.vmem %s5, %s210
      %p212 = scmp.lt.s32.totalorder %s16, 1
      %s213 = scalar_select %p212, %s16, 1
      %s214 = smul.addr %s213, 8
      %s215 = scalar_lea.vmem %s0, %s214
      %p216 = scmp.lt.s32.totalorder %s16, 1
      %s217 = scalar_select %p216, %s16, 1
      %s218 = smul.addr %s217, 8
      %s219 = scalar_lea.vmem %s5, %s218
      %v220 = vld [vmem:[%s215] sm:$0xff]
      %v221 = vld [vmem:[%s1] sm:$0xff]
      %v222 = vld [vmem:[%s1 + $0x8] sm:$0xff]
      %v223 = vld [vmem:[%s1 + $0x10] sm:$0xff]
      %v224 = vld [vmem:[%s1 + $0x18] sm:$0xff]
      %v225 = vld [vmem:[%s2] sm:$0x1]
      %v227 = vlaneseq
      %v228 = vshrl.u32 %v227, 7
      %v229 = vsub.s32 0, %v228
      %v230 = vrot.slane %v225, %v229
      %vm232 = vcmask 261120
      %v234 = vsel %vm232, %v220, 0
      %236 = vmatprep.subr.mxu0 0.0
      %237 = vmatpush1.msra.mxu0 %v221
      %238 = vmatprep.subr.mxu0 0.0
      %239 = vmatpush1.msra.mxu0 %v222
      %240 = vmatprep.subr.mxu0 0.0
      %241 = vmatpush1.msra.mxu0 %v223
      %242 = vmatprep.subr.mxu0 0.0
      %243 = vmatpush1.msra.mxu0 %v224
      %244 = vmatprep.subr.mxu0 0.0
      %245 = vmatpush1.msra.mxu0 0.0
      %246 = vmatprep.subr.mxu0 0.0
      %247 = vmatpush1.msra.mxu0 0.0
      %248 = vmatprep.subr.mxu0 0.0
      %249 = vmatpush1.msra.mxu0 0.0
      %250 = vmatprep.subr.mxu0 0.0
      %251 = vmatpush1.msra.mxu0 0.0
      %252 = vmatprep.subr.mxu0 0.0
      %253 = vmatpush1.msra.mxu0 0.0
      %254 = vmatprep.subr.mxu0 0.0
      %255 = vmatpush1.msra.mxu0 0.0
      %256 = vmatprep.subr.mxu0 0.0
      %257 = vmatpush1.msra.mxu0 0.0
      %258 = vmatprep.subr.mxu0 0.0
      %259 = vmatpush1.msra.mxu0 0.0
      %260 = vmatprep.subr.mxu0 0.0
      %261 = vmatpush1.msra.mxu0 0.0
      %262 = vmatprep.subr.mxu0 0.0
      %263 = vmatpush1.msra.mxu0 0.0
      %264 = vmatprep.subr.mxu0 0.0
      %265 = vmatpush1.msra.mxu0 0.0
      %266 = vmatprep.subr.mxu0 0.0
      %267 = vmatpush1.msra.mxu0 0.0
      %268 = vmatprep.subr.mxu0 0.0
      %269 = vmatpush1.msra.mxu0 0.0
      %270 = vmatprep.subr.mxu0 0.0
      %271 = vmatpush1.msra.mxu0 0.0
      %272 = vmatprep.subr.mxu0 0.0
      %273 = vmatpush1.msra.mxu0 0.0
      %274 = vmatprep.subr.mxu0 0.0
      %275 = vmatpush1.msra.mxu0 0.0
      %276 = vmatprep.subr.mxu0 0.0
      %277 = vmatpush1.msra.mxu0 0.0
      %278 = vmatprep.subr.mxu0 0.0
      %279 = vmatpush1.msra.mxu0 0.0
      %280 = vmatprep.subr.mxu0 0.0
      %281 = vmatpush1.msra.mxu0 0.0
      %282 = vmatprep.subr.mxu0 0.0
      %283 = vmatpush1.msra.mxu0 0.0
      %284 = vmatprep.subr.mxu0 0.0
      %285 = vmatpush1.msra.mxu0 0.0
      %286 = vmatprep.subr.mxu0 0.0
      %287 = vmatpush1.msra.mxu0 0.0
      %288 = vmatprep.subr.mxu0 0.0
      %289 = vmatpush1.msra.mxu0 0.0
      %290 = vmatprep.subr.mxu0 0.0
      %291 = vmatpush1.msra.mxu0 0.0
      %292 = vmatprep.subr.mxu0 0.0
      %293 = vmatpush1.msra.mxu0 0.0
      %294 = vmatprep.subr.mxu0 0.0
      %295 = vmatpush1.msra.mxu0 0.0
      %296 = vmatprep.subr.mxu0 0.0
      %297 = vmatpush1.msra.mxu0 0.0
      %298 = vmatprep.subr.mxu0 0.0
      %299 = vmatpush1.msra.mxu0 0.0
      %300 = vmatprep.mubr.f32.mxu0 0.0
      %301 = vmatmul.mubr.f32.gmra.mrb[0].mxu0 %v234
      %v302 = vpop.f32.mrb[0].mxu0
      %v303 = vadd.f32 %v230, %v302
      %v304 = vpop.f32.mrb[0].mxu0
      %305 = vdwg.mxu0
      %v306 = vmax.f32 %v303, 0.0
      %v307 = vld [vmem:[%s3] sm:$0xff]
      %v308 = vld [vmem:[%s3 + $0x8] sm:$0xff]
      %v309 = vld [vmem:[%s3 + $0x10] sm:$0xff]
      %v310 = vld [vmem:[%s3 + $0x18] sm:$0xff]
      %v311 = vld [vmem:[%s3 + $0x20] sm:$0xff]
      %v312 = vld [vmem:[%s3 + $0x28] sm:$0xff]
      %v313 = vld [vmem:[%s3 + $0x30] sm:$0xff]
      %v314 = vld [vmem:[%s3 + $0x38] sm:$0xff]
      %v315 = vld [vmem:[%s4] sm:$0x1]
      %v317 = vlaneseq
      %v318 = vshrl.u32 %v317, 7
      %v319 = vsub.s32 0, %v318
      %v320 = vrot.slane %v315, %v319
      %vm322 = vcmask 523264
      %v324 = vsel %vm322, %v306, 0
      %326 = vmatprep.subr.mxu0 0.0
      %327 = vmatpush1.msra.mxu0 %v307
      %328 = vmatprep.subr.mxu0 0.0
      %329 = vmatpush1.msra.mxu0 %v308
      %330 = vmatprep.subr.mxu0 0.0
      %331 = vmatpush1.msra.mxu0 %v309
      %332 = vmatprep.subr.mxu0 0.0
      %333 = vmatpush1.msra.mxu0 %v310
      %334 = vmatprep.subr.mxu0 0.0
      %335 = vmatpush1.msra.mxu0 %v311
      %336 = vmatprep.subr.mxu0 0.0
      %337 = vmatpush1.msra.mxu0 %v312
      %338 = vmatprep.subr.mxu0 0.0
      %339 = vmatpush1.msra.mxu0 %v313
      %340 = vmatprep.subr.mxu0 0.0
      %341 = vmatpush1.msra.mxu0 %v314
      %342 = vmatprep.subr.mxu0 0.0
      %343 = vmatpush1.msra.mxu0 0.0
      %344 = vmatprep.subr.mxu0 0.0
      %345 = vmatpush1.msra.mxu0 0.0
      %346 = vmatprep.subr.mxu0 0.0
      %347 = vmatpush1.msra.mxu0 0.0
      %348 = vmatprep.subr.mxu0 0.0
      %349 = vmatpush1.msra.mxu0 0.0
      %350 = vmatprep.subr.mxu0 0.0
      %351 = vmatpush1.msra.mxu0 0.0
      %352 = vmatprep.subr.mxu0 0.0
      %353 = vmatpush1.msra.mxu0 0.0
      %354 = vmatprep.subr.mxu0 0.0
      %355 = vmatpush1.msra.mxu0 0.0
      %356 = vmatprep.subr.mxu0 0.0
      %357 = vmatpush1.msra.mxu0 0.0
      %358 = vmatprep.subr.mxu0 0.0
      %359 = vmatpush1.msra.mxu0 0.0
      %360 = vmatprep.subr.mxu0 0.0
      %361 = vmatpush1.msra.mxu0 0.0
      %362 = vmatprep.subr.mxu0 0.0
      %363 = vmatpush1.msra.mxu0 0.0
      %364 = vmatprep.subr.mxu0 0.0
      %365 = vmatpush1.msra.mxu0 0.0
      %366 = vmatprep.subr.mxu0 0.0
      %367 = vmatpush1.msra.mxu0 0.0
      %368 = vmatprep.subr.mxu0 0.0
      %369 = vmatpush1.msra.mxu0 0.0
      %370 = vmatprep.subr.mxu0 0.0
      %371 = vmatpush1.msra.mxu0 0.0
      %372 = vmatprep.subr.mxu0 0.0
      %373 = vmatpush1.msra.mxu0 0.0
      %374 = vmatprep.subr.mxu0 0.0
      %375 = vmatpush1.msra.mxu0 0.0
      %376 = vmatprep.subr.mxu0 0.0
      %377 = vmatpush1.msra.mxu0 0.0
      %378 = vmatprep.subr.mxu0 0.0
      %379 = vmatpush1.msra.mxu0 0.0
      %380 = vmatprep.subr.mxu0 0.0
      %381 = vmatpush1.msra.mxu0 0.0
      %382 = vmatprep.subr.mxu0 0.0
      %383 = vmatpush1.msra.mxu0 0.0
      %384 = vmatprep.subr.mxu0 0.0
      %385 = vmatpush1.msra.mxu0 0.0
      %386 = vmatprep.subr.mxu0 0.0
      %387 = vmatpush1.msra.mxu0 0.0
      %388 = vmatprep.subr.mxu0 0.0
      %389 = vmatpush1.msra.mxu0 0.0
      %390 = vmatprep.mubr.f32.mxu0 0.0
      %391 = vmatmul.mubr.f32.gmra.mrb[0].mxu0 %v324
      %v392 = vpop.f32.mrb[0].mxu0
      %v393 = vadd.f32 %v320, %v392
      %v394 = vpop.f32.mrb[0].mxu0
      %395 = vdwg.mxu0
      %vm396 = vcmask 64512
      %v397 = vsel %vm396, %v393, -inf
      %398 = vmax.xlane.f32.xlu0 %v397
      %v399 = vpop.xlane.xlu0 %398
      %v400 = vsub.f32 %v393, %v399
      %v401 = vmul.f32 %v400, 1.442695
      %v402 = vpow.pop %v401
      %v403 = vsel %vm396, %v402, 0.0
      %404 = vadd.xlane.f32.xlu0 %v403
      %v405 = vpop.xlane.xlu0 %404
      %v406 = vrcp.pop %v405
      %v407 = vmul.f32 %v402, %v406
      %408 = vst.msk [vmem:[%s219] sm:$0xff] %vm396, %v407
      %p409 = scmp.lt.s32.totalorder %s16, 1
      %s410 = scalar_select %p409, %s16, 1
      %s411 = smul.addr %s410, 8
      %s412 = scalar_lea.vmem %s5, %s411
      // Predicated region
      $region41: #{tpu_custom_call.1} parent=39 // pred_check
        %p413 = pneg %p144
      $region42: #{tpu_custom_call.1} parent=39 // pred_check_branch
        %415 = sbr.rel (%p413) target = $region44
      $region43: #{tpu_custom_call.1} parent=39 // pred_region
        _
      $region44: #{tpu_custom_call.1} parent=39 // pred_fallthru
        _
    $region40: #{tpu_custom_call.1} parent=5 // pred_fallthru
      _
    %p416 = scmp.le.s32.totalorder 2, %s11
    // Predicated region
    $region45: #{tpu_custom_call.1} parent=5 // pred_check
      %p417 = pneg %p416
    $region46: #{tpu_custom_call.1} parent=5 // pred_check_branch
      %419 = sbr.rel (%p417) target = $region48
    $region47: #{tpu_custom_call.1} parent=5 // pred_region
      %s420 = ssub.s32 %s11, 2
      // Predicated region
      $region49: #{tpu_custom_call.1} parent=47 // pred_check
        %p421 = pneg %p150
      $region50: #{tpu_custom_call.1} parent=47 // pred_check_branch
        %423 = sbr.rel (%p421) target = $region52
      $region51: #{tpu_custom_call.1} parent=47 // pred_region
        %p424 = scmp.lt.s32.totalorder %s17, 1
        %s425 = scalar_select %p424, %s17, 1
        %s426 = smul.addr %s425, 8
        %s427 = scalar_lea.vmem %s5, %s426
      $region52: #{tpu_custom_call.1} parent=47 // pred_fallthru
        _
    $region48: #{tpu_custom_call.1} parent=5 // pred_fallthru
      _
  $region6: #{tpu_custom_call.1} parent=0 // loop_footer
    %s15 = sadd.s32 1, %s11
  $region7: #{tpu_custom_call.1} parent=0 // loop_footer_branch
    %10 = sbr.rel target = $region3
  $region8: #{tpu_custom_call.1} parent=0 // loop_exit
    _

</llo_original>
